<compile_context>
chip_gen: v5e
topology: v5e:2x2
jax: 0.10.0
libtpu: 0.0.40
codegen_flags: <defaults>
</compile_context>

<pallas_src>
import math

import jax
import jax.numpy as jnp
from jax.experimental import pallas as pl
from jax.experimental.pallas import tpu as pltpu

# ---------------- config (GemmoeDynConfig fields, small synthetic sizes) ----------
HIDDEN = 32             # config.hidden_size
NUM_HEADS = 4           # config.num_attention_heads
HEAD_DIM = 16           # config.head_dim
NUM_KV_HEADS = 2        # config.num_key_value_heads
N_REP = NUM_HEADS // NUM_KV_HEADS
ROPE_THETA = 10000.0    # config.rope_theta
ATTN_DROPOUT = 0.0      # config.attention_dropout (0.0 -> no-op)
ATTENTION_BIAS = False  # config.attention_bias -> no biases

Q_DIM = NUM_HEADS * HEAD_DIM             # 64
QK_W = (N_REP + 1) * HEAD_DIM            # 48  per-group roped width: n_rep q heads + 1 k head
GROUP_W = 2 * QK_W + HEAD_DIM            # 112 per-group fused width: [q,k | q_rot,k_rot | v]

COMPUTE_DTYPE = jnp.bfloat16             # MXU operand dtype (f32 accumulation)


# ---------------- fused forward kernel (per batch element, per kv group) ----------
def _fused_attn_kernel(x_ref, wqkv_ref, wo_ref, cos_ref, sin_ref, o_ref, acc_ref):
    g = pl.program_id(1)
    S = x_ref.shape[1]
    D = HEAD_DIM

    x = x_ref[0]                                        # (S, HIDDEN) bf16
    w = wqkv_ref[0]                                     # (HIDDEN, GROUP_W) bf16

    # Fused projection for this kv group: [q, k, rotate_half(q), rotate_half(k), v].
    # The rotation is baked into the weight (block-diagonal R), so RoPE below is
    # purely element-wise; 1/sqrt(D) is already folded into the q / q_rot columns.
    qkv = jnp.dot(x, w, preferred_element_type=jnp.float32)        # (S, GROUP_W) f32

    cos = cos_ref[0]                                    # (S, QK_W) f32
    sin = sin_ref[0]                                    # (S, QK_W) f32
    qk = qkv[:, :QK_W] * cos + qkv[:, QK_W:2 * QK_W] * sin          # RoPE'd [q | k], f32
    v = qkv[:, 2 * QK_W:].astype(COMPUTE_DTYPE)                     # (S, D)
    k = qk[:, N_REP * D:].astype(COMPUTE_DTYPE)                     # (S, D)

    # Additive causal mask generated in-kernel (no O(S^2) HBM stream).
    row = jax.lax.broadcasted_iota(jnp.int32, (S, S), 0)
    col = jax.lax.broadcasted_iota(jnp.int32, (S, S), 1)
    causal = col <= row                                             # (S, S) bool
    neg = jnp.float32(-1e30)   # large-but-safe "-inf" (vs finfo.min; benign post-softmax)

    acc = jnp.zeros((S, HIDDEN), jnp.float32)
    for r in range(N_REP):                              # n_rep query heads share this kv head
        q_r = qk[:, r * D:(r + 1) * D].astype(COMPUTE_DTYPE)        # (S, D)
        # q @ k^T expressed via dot_general (contract last dims) -> no explicit .T
        s = jax.lax.dot_general(q_r, k, (((1,), (1,)), ((), ())),
                                preferred_element_type=jnp.float32)  # (S, S) f32
        s = jnp.where(causal, s, neg)

        m = jnp.max(s, axis=-1, keepdims=True)                      # exact f32 softmax
        p = jnp.exp(s - m)
        denom = jnp.sum(p, axis=-1, keepdims=True)
        # approx reciprocal runs on the EUP (free slot); ~1e-3-accurate normalization.
        probs = (p * pl.reciprocal(denom, approx=True)).astype(COMPUTE_DTYPE)
        # (dropout with p=0.0 is a no-op)

        o_r = jnp.dot(probs, v, preferred_element_type=jnp.float32)  # (S, D) f32
        wo_r = wo_ref[0, r * D:(r + 1) * D, :]                       # (D, HIDDEN) bf16
        # Per-head output projection accumulated directly (no lane-concat of heads).
        acc += jnp.dot(o_r.astype(COMPUTE_DTYPE), wo_r,
                       preferred_element_type=jnp.float32)           # (S, HIDDEN)

    @pl.when(g == 0)
    def _():
        acc_ref[...] = jnp.zeros_like(acc_ref)

    acc_ref[...] += acc

    @pl.when(g == pl.num_programs(1) - 1)
    def _():
        o_ref[0] = acc_ref[...].astype(o_ref.dtype)


@jax.jit
def gemmoe_dyn_attention_forward(params, hidden_states, position_ids):
    B, S, H = hidden_states.shape
    cos_h, sin_h = rope_cos_sin(position_ids, HEAD_DIM, ROPE_THETA)   # (B,S,D) f32
    # Pre-tile to the per-group roped width (n_rep q heads + 1 k head); f32 so the
    # in-kernel RoPE math needs no casts.  Kept per-batch: position_ids may differ.
    cos = jnp.tile(cos_h, (1, 1, N_REP + 1))                          # (B, S, QK_W)
    sin = jnp.tile(sin_h, (1, 1, N_REP + 1))
    x = hidden_states.astype(COMPUTE_DTYPE)                           # halve DMA bytes

    return pl.pallas_call(
        _fused_attn_kernel,
        out_shape=jax.ShapeDtypeStruct((B, S, H), hidden_states.dtype),
        grid=(B, NUM_KV_HEADS),                                       # kv-group innermost
        in_specs=[
            pl.BlockSpec((1, S, H), lambda b, g: (b, 0, 0)),          # hidden_states (bf16)
            pl.BlockSpec((1, H, GROUP_W), lambda b, g: (g, 0, 0)),    # fused per-group wqkv
            pl.BlockSpec((1, N_REP * HEAD_DIM, H), lambda b, g: (g, 0, 0)),  # per-group wo rows
            pl.BlockSpec((1, S, QK_W), lambda b, g: (b, 0, 0)),       # cos (f32)
            pl.BlockSpec((1, S, QK_W), lambda b, g: (b, 0, 0)),       # sin (f32)
        ],
        out_specs=pl.BlockSpec((1, S, H), lambda b, g: (b, 0, 0)),    # resident over g
        scratch_shapes=[pltpu.VMEM((S, H), jnp.float32)],             # o_proj accumulator
        compiler_params=pltpu.CompilerParams(
            dimension_semantics=("parallel", "arbitrary"),            # batch over TCs
            vmem_limit_bytes=32 * 1024 * 1024),                       # safe on v5e/v6e/v7x
    )(x, params["wqkv_g"], params["wo_g"], cos, sin)


# ---------------- glue: RoPE tables, parameters -----------------------------------
def rope_cos_sin(position_ids, dim, base):
    # GemmoeDynRotaryEmbedding.forward (kept in f32: RoPE math is done in f32 in-kernel)
    inv_freq = 1.0 / (base ** (jnp.arange(0, dim, 2, dtype=jnp.float32) / dim))
    freqs = position_ids.astype(jnp.float32)[:, :, None] * inv_freq[None, None, :]
    emb = jnp.concatenate([freqs, freqs], axis=-1)                    # (B, S, D)
    return jnp.cos(emb), jnp.sin(emb)


def init_params(key, dtype=jnp.float32):
    k1, k2, k3, k4 = jax.random.split(key, 4)
    s = 0.05
    wq = (jax.random.normal(k1, (NUM_HEADS * HEAD_DIM, HIDDEN)) * s).astype(dtype)
    wk = (jax.random.normal(k2, (NUM_KV_HEADS * HEAD_DIM, HIDDEN)) * s).astype(dtype)
    wv = (jax.random.normal(k3, (NUM_KV_HEADS * HEAD_DIM, HIDDEN)) * s).astype(dtype)
    wo = (jax.random.normal(k4, (HIDDEN, NUM_HEADS * HEAD_DIM)) * s).astype(dtype)

    D, half = HEAD_DIM, HEAD_DIM // 2
    # R such that (x @ R) == rotate_half(x) for a single head:  R = [[0, I],[-I, 0]]
    R = jnp.zeros((D, D), jnp.float32)
    R = R.at[jnp.arange(half), jnp.arange(half) + half].set(1.0)
    R = R.at[jnp.arange(half) + half, jnp.arange(half)].set(-1.0)

    scale = 1.0 / math.sqrt(D)                       # softmax scale folded into q columns
    wq_t = (wq.T * scale).astype(jnp.float32)        # (HIDDEN, Q_DIM)
    wk_t = wk.T.astype(jnp.float32)                  # (HIDDEN, KV_DIM)
    wv_t = wv.T.astype(jnp.float32)
    wo_t = wo.T.astype(jnp.float32)                  # (Q_DIM, HIDDEN)

    groups_w, groups_wo = [], []
    for g in range(NUM_KV_HEADS):
        q_cols = wq_t[:, g * N_REP * D:(g + 1) * N_REP * D]          # (H, N_REP*D)
        k_cols = wk_t[:, g * D:(g + 1) * D]                          # (H, D)
        v_cols = wv_t[:, g * D:(g + 1) * D]                          # (H, D)
        q_rot = jnp.concatenate(
            [q_cols[:, r * D:(r + 1) * D] @ R for r in range(N_REP)], axis=1)
        k_rot = k_cols @ R
        # layout per group: [q (N_REP*D), k (D), q_rot (N_REP*D), k_rot (D), v (D)]
        groups_w.append(jnp.concatenate([q_cols, k_cols, q_rot, k_rot, v_cols], axis=1))
        groups_wo.append(wo_t[g * N_REP * D:(g + 1) * N_REP * D, :])  # rows for this group's q heads

    wqkv_g = jnp.stack(groups_w).astype(COMPUTE_DTYPE)   # (G, HIDDEN, GROUP_W) bf16
    wo_g = jnp.stack(groups_wo).astype(COMPUTE_DTYPE)    # (G, N_REP*D, HIDDEN) bf16
    return {"wq": wq, "wk": wk, "wv": wv, "wo": wo, "wqkv_g": wqkv_g, "wo_g": wo_g}


# ---------------- pure-JAX reference (mirrors the PyTorch forward, f32) -----------
def reference_forward(params, hidden_states, attention_mask, position_ids):
    B, S, H = hidden_states.shape
    q = (hidden_states @ params["wq"].T).reshape(B, S, NUM_HEADS, HEAD_DIM).transpose(0, 2, 1, 3)
    k = (hidden_states @ params["wk"].T).reshape(B, S, NUM_KV_HEADS, HEAD_DIM).transpose(0, 2, 1, 3)
    v = (hidden_states @ params["wv"].T).reshape(B, S, NUM_KV_HEADS, HEAD_DIM).transpose(0, 2, 1, 3)
    cos, sin = rope_cos_sin(position_ids, HEAD_DIM, ROPE_THETA)

    def rotate_half(x):
        x1 = x[..., : x.shape[-1] // 2]
        x2 = x[..., x.shape[-1] // 2:]
        return jnp.concatenate([-x2, x1], axis=-1)

    c = cos[:, None]; si = sin[:, None]
    q = q * c + rotate_half(q) * si
    k = k * c + rotate_half(k) * si
    k = jnp.repeat(k, N_REP, axis=1)
    v = jnp.repeat(v, N_REP, axis=1)
    w = jnp.einsum("bhqd,bhkd->bhqk", q, k) / math.sqrt(HEAD_DIM) + attention_mask
    w = jax.nn.softmax(w.astype(jnp.float32), axis=-1).astype(q.dtype)
    o = jnp.einsum("bhqk,bhkd->bhqd", w, v)
    o = o.transpose(0, 2, 1, 3).reshape(B, S, NUM_HEADS * HEAD_DIM)
    return o @ params["wo"].T


if __name__ == "__main__":
    B, S = 2, 8
    key = jax.random.PRNGKey(0)
    kx, kp = jax.random.split(key)
    hidden_states = jax.random.normal(kx, (B, S, HIDDEN), dtype=jnp.float32)
    params = init_params(kp)
    position_ids = jnp.broadcast_to(jnp.arange(S, dtype=jnp.int32)[None, :], (B, S))

    out = gemmoe_dyn_attention_forward(params, hidden_states, position_ids)
    out = jax.block_until_ready(out)

    # reference uses the standard HF additive causal mask (what the kernel builds in-VMEM)
    neg = jnp.finfo(jnp.float32).min
    causal = jnp.tril(jnp.ones((S, S), dtype=bool))
    attention_mask = jnp.where(causal, 0.0, neg).astype(jnp.float32)
    attention_mask = jnp.broadcast_to(attention_mask[None, None], (B, 1, S, S))
    ref = reference_forward(params, hidden_states, attention_mask, position_ids)

    assert out.shape == (B, S, HIDDEN)
    # bf16 MXU operands + approx reciprocal -> slightly looser tolerance than pure f32
    assert jnp.allclose(out, ref, atol=2e-2, rtol=2e-2), (
        f"mismatch vs pure-JAX reference (max abs err {jnp.max(jnp.abs(out - ref))})")

    print("KERNEL_OK")
</pallas_src>

<mosaic_0001>
module attributes {stable_mosaic.version = 11 : i64} {
  func.func @_fused_attn_kernel(%arg0: i32, %arg1: i32, %arg2: memref<1x8x32xbf16, #tpu.memory_space<vmem>>, %arg3: memref<1x32x112xbf16, #tpu.memory_space<vmem>>, %arg4: memref<1x32x32xbf16, #tpu.memory_space<vmem>>, %arg5: memref<1x8x48xf32, #tpu.memory_space<vmem>>, %arg6: memref<1x8x48xf32, #tpu.memory_space<vmem>>, %arg7: memref<1x8x32xf32, #tpu.memory_space<vmem>>, %arg8: memref<8x32xf32, #tpu.memory_space<vmem>>) attributes {dimension_semantics = [#tpu.dimension_semantics<parallel>, #tpu.dimension_semantics<arbitrary>], iteration_bounds = array<i64: 2, 2>, scalar_prefetch = 0 : i64, scratch_operands = 1 : i64, tpu.core_type = #tpu.core_type<tc>, window_params = [{transform_indices = @transform_0, window_bounds = array<i64: 1, 8, 32>}, {transform_indices = @transform_1, window_bounds = array<i64: 1, 32, 112>}, {transform_indices = @transform_2, window_bounds = array<i64: 1, 32, 32>}, {transform_indices = @transform_3, window_bounds = array<i64: 1, 8, 48>}, {transform_indices = @transform_4, window_bounds = array<i64: 1, 8, 48>}, {transform_indices = @transform_5, window_bounds = array<i64: 1, 8, 32>}]} {
    %c0 = arith.constant 0 : index
    %c0_0 = arith.constant 0 : index
    %c0_1 = arith.constant 0 : index
    %0 = vector.load %arg2[%c0, %c0_0, %c0_1] : memref<1x8x32xbf16, #tpu.memory_space<vmem>>, vector<1x8x32xbf16>
    %1 = vector.shape_cast %0 : vector<1x8x32xbf16> to vector<8x32xbf16>
    %c0_2 = arith.constant 0 : index
    %c0_3 = arith.constant 0 : index
    %c0_4 = arith.constant 0 : index
    %2 = vector.load %arg3[%c0_2, %c0_3, %c0_4] : memref<1x32x112xbf16, #tpu.memory_space<vmem>>, vector<1x32x112xbf16>
    %3 = vector.shape_cast %2 : vector<1x32x112xbf16> to vector<32x112xbf16>
    %cst = arith.constant dense<0.000000e+00> : vector<8x112xf32>
    %4 = tpu.matmul %1, %3, %cst {dimension_numbers = #tpu.dot_dimension_numbers<[1], [0], [0], [1], [0, 0, 1, 1], [], []>} : vector<8x32xbf16>, vector<32x112xbf16>, vector<8x112xf32> -> vector<8x112xf32>
    %c0_5 = arith.constant 0 : index
    %c0_6 = arith.constant 0 : index
    %c0_7 = arith.constant 0 : index
    %5 = vector.load %arg5[%c0_5, %c0_6, %c0_7] : memref<1x8x48xf32, #tpu.memory_space<vmem>>, vector<1x8x48xf32>
    %6 = vector.shape_cast %5 : vector<1x8x48xf32> to vector<8x48xf32>
    %c0_8 = arith.constant 0 : index
    %c0_9 = arith.constant 0 : index
    %c0_10 = arith.constant 0 : index
    %7 = vector.load %arg6[%c0_8, %c0_9, %c0_10] : memref<1x8x48xf32, #tpu.memory_space<vmem>>, vector<1x8x48xf32>
    %8 = vector.shape_cast %7 : vector<1x8x48xf32> to vector<8x48xf32>
    %9 = vector.extract_strided_slice %4 {offsets = [0, 0], sizes = [8, 48], strides = [1, 1]} : vector<8x112xf32> to vector<8x48xf32>
    %10 = arith.mulf %9, %6 : vector<8x48xf32>
    %11 = vector.extract_strided_slice %4 {offsets = [0, 48], sizes = [8, 48], strides = [1, 1]} : vector<8x112xf32> to vector<8x48xf32>
    %12 = arith.mulf %11, %8 : vector<8x48xf32>
    %13 = arith.addf %10, %12 : vector<8x48xf32>
    %14 = vector.extract_strided_slice %4 {offsets = [0, 96], sizes = [8, 16], strides = [1, 1]} : vector<8x112xf32> to vector<8x16xf32>
    %15 = arith.truncf %14 : vector<8x16xf32> to vector<8x16xbf16>
    %16 = vector.extract_strided_slice %13 {offsets = [0, 32], sizes = [8, 16], strides = [1, 1]} : vector<8x48xf32> to vector<8x16xf32>
    %17 = arith.truncf %16 : vector<8x16xf32> to vector<8x16xbf16>
    %18 = tpu.iota {dimensions = array<i32: 0>} : vector<8x8xi32>
    %19 = tpu.iota {dimensions = array<i32: 1>} : vector<8x8xi32>
    %20 = arith.cmpi sle, %19, %18 : vector<8x8xi32>
    %cst_11 = arith.constant 0.000000e+00 : f32
    %21 = vector.broadcast %cst_11 : f32 to vector<8x32xf32>
    %22 = vector.extract_strided_slice %13 {offsets = [0, 0], sizes = [8, 16], strides = [1, 1]} : vector<8x48xf32> to vector<8x16xf32>
    %23 = arith.truncf %22 : vector<8x16xf32> to vector<8x16xbf16>
    %cst_12 = arith.constant dense<0.000000e+00> : vector<8x8xf32>
    %24 = tpu.matmul %23, %17, %cst_12 {dimension_numbers = #tpu.dot_dimension_numbers<[1], [1], [0], [0], [0, 0, 1, 0], [], []>} : vector<8x16xbf16>, vector<8x16xbf16>, vector<8x8xf32> -> vector<8x8xf32>
    %cst_13 = arith.constant -1.000000e+30 : f32
    %25 = vector.broadcast %cst_13 : f32 to vector<8x8xf32>
    %26 = arith.select %20, %24, %25 : vector<8x8xi1>, vector<8x8xf32>
    %cst_14 = arith.constant dense<0xFF800000> : vector<8xf32>
    %27 = vector.multi_reduction <maximumf>, %26, %cst_14 [1] : vector<8x8xf32> to vector<8xf32>
    %28 = vector.shape_cast %27 : vector<8xf32> to vector<8x1xf32>
    %29 = vector.broadcast %28 : vector<8x1xf32> to vector<8x8xf32>
    %30 = arith.subf %26, %29 : vector<8x8xf32>
    %31 = math.exp %30 : vector<8x8xf32>
    %cst_15 = arith.constant dense<0.000000e+00> : vector<8xf32>
    %32 = vector.multi_reduction <add>, %31, %cst_15 [1] : vector<8x8xf32> to vector<8xf32>
    %33 = vector.shape_cast %32 : vector<8xf32> to vector<8x1xf32>
    %34 = tpu.reciprocal %33 {approx = true} : vector<8x1xf32> -> vector<8x1xf32>
    %35 = vector.broadcast %34 : vector<8x1xf32> to vector<8x8xf32>
    %36 = arith.mulf %31, %35 : vector<8x8xf32>
    %37 = arith.truncf %36 : vector<8x8xf32> to vector<8x8xbf16>
    %cst_16 = arith.constant dense<0.000000e+00> : vector<8x16xf32>
    %38 = tpu.matmul %37, %15, %cst_16 {dimension_numbers = #tpu.dot_dimension_numbers<[1], [0], [0], [1], [0, 0, 1, 1], [], []>} : vector<8x8xbf16>, vector<8x16xbf16>, vector<8x16xf32> -> vector<8x16xf32>
    %c0_17 = arith.constant 0 : index
    %c0_18 = arith.constant 0 : index
    %c0_19 = arith.constant 0 : index
    %39 = vector.load %arg4[%c0_17, %c0_18, %c0_19] : memref<1x32x32xbf16, #tpu.memory_space<vmem>>, vector<1x16x32xbf16>
    %40 = vector.shape_cast %39 : vector<1x16x32xbf16> to vector<16x32xbf16>
    %41 = arith.truncf %38 : vector<8x16xf32> to vector<8x16xbf16>
    %cst_20 = arith.constant dense<0.000000e+00> : vector<8x32xf32>
    %42 = tpu.matmul %41, %40, %cst_20 {dimension_numbers = #tpu.dot_dimension_numbers<[1], [0], [0], [1], [0, 0, 1, 1], [], []>} : vector<8x16xbf16>, vector<16x32xbf16>, vector<8x32xf32> -> vector<8x32xf32>
    %43 = arith.addf %21, %42 : vector<8x32xf32>
    %44 = vector.extract_strided_slice %13 {offsets = [0, 16], sizes = [8, 16], strides = [1, 1]} : vector<8x48xf32> to vector<8x16xf32>
    %45 = arith.truncf %44 : vector<8x16xf32> to vector<8x16xbf16>
    %cst_21 = arith.constant dense<0.000000e+00> : vector<8x8xf32>
    %46 = tpu.matmul %45, %17, %cst_21 {dimension_numbers = #tpu.dot_dimension_numbers<[1], [1], [0], [0], [0, 0, 1, 0], [], []>} : vector<8x16xbf16>, vector<8x16xbf16>, vector<8x8xf32> -> vector<8x8xf32>
    %cst_22 = arith.constant -1.000000e+30 : f32
    %47 = vector.broadcast %cst_22 : f32 to vector<8x8xf32>
    %48 = arith.select %20, %46, %47 : vector<8x8xi1>, vector<8x8xf32>
    %cst_23 = arith.constant dense<0xFF800000> : vector<8xf32>
    %49 = vector.multi_reduction <maximumf>, %48, %cst_23 [1] : vector<8x8xf32> to vector<8xf32>
    %50 = vector.shape_cast %49 : vector<8xf32> to vector<8x1xf32>
    %51 = vector.broadcast %50 : vector<8x1xf32> to vector<8x8xf32>
    %52 = arith.subf %48, %51 : vector<8x8xf32>
    %53 = math.exp %52 : vector<8x8xf32>
    %cst_24 = arith.constant dense<0.000000e+00> : vector<8xf32>
    %54 = vector.multi_reduction <add>, %53, %cst_24 [1] : vector<8x8xf32> to vector<8xf32>
    %55 = vector.shape_cast %54 : vector<8xf32> to vector<8x1xf32>
    %56 = tpu.reciprocal %55 {approx = true} : vector<8x1xf32> -> vector<8x1xf32>
    %57 = vector.broadcast %56 : vector<8x1xf32> to vector<8x8xf32>
    %58 = arith.mulf %53, %57 : vector<8x8xf32>
    %59 = arith.truncf %58 : vector<8x8xf32> to vector<8x8xbf16>
    %cst_25 = arith.constant dense<0.000000e+00> : vector<8x16xf32>
    %60 = tpu.matmul %59, %15, %cst_25 {dimension_numbers = #tpu.dot_dimension_numbers<[1], [0], [0], [1], [0, 0, 1, 1], [], []>} : vector<8x8xbf16>, vector<8x16xbf16>, vector<8x16xf32> -> vector<8x16xf32>
    %c0_26 = arith.constant 0 : index
    %c16 = arith.constant 16 : index
    %c0_27 = arith.constant 0 : index
    %61 = vector.load %arg4[%c0_26, %c16, %c0_27] : memref<1x32x32xbf16, #tpu.memory_space<vmem>>, vector<1x16x32xbf16>
    %62 = vector.shape_cast %61 : vector<1x16x32xbf16> to vector<16x32xbf16>
    %63 = arith.truncf %60 : vector<8x16xf32> to vector<8x16xbf16>
    %cst_28 = arith.constant dense<0.000000e+00> : vector<8x32xf32>
    %64 = tpu.matmul %63, %62, %cst_28 {dimension_numbers = #tpu.dot_dimension_numbers<[1], [0], [0], [1], [0, 0, 1, 1], [], []>} : vector<8x16xbf16>, vector<16x32xbf16>, vector<8x32xf32> -> vector<8x32xf32>
    %65 = arith.addf %43, %64 : vector<8x32xf32>
    %c0_i32 = arith.constant 0 : i32
    %66 = arith.cmpi eq, %arg1, %c0_i32 : i32
    %67 = arith.extui %66 : i1 to i32
    %c0_i32_29 = arith.constant 0 : i32
    %68 = arith.cmpi ne, %67, %c0_i32_29 : i32
    scf.if %68 {
      %cst_35 = arith.constant 0.000000e+00 : f32
      %75 = vector.broadcast %cst_35 : f32 to vector<8x32xf32>
      %c0_36 = arith.constant 0 : index
      %c0_37 = arith.constant 0 : index
      %76 = vector.load %arg8[%c0_36, %c0_37] : memref<8x32xf32, #tpu.memory_space<vmem>>, vector<8x32xf32>
      tpu.vector_store %arg8[%c0_36, %c0_37], %75 {strides = array<i32>} : memref<8x32xf32, #tpu.memory_space<vmem>>, vector<8x32xf32>,
    } else {
    }
    %c0_30 = arith.constant 0 : index
    %c0_31 = arith.constant 0 : index
    %69 = vector.load %arg8[%c0_30, %c0_31] : memref<8x32xf32, #tpu.memory_space<vmem>>, vector<8x32xf32>
    %70 = arith.addf %69, %65 : vector<8x32xf32>
    %c0_32 = arith.constant 0 : index
    %c0_33 = arith.constant 0 : index
    %71 = vector.load %arg8[%c0_32, %c0_33] : memref<8x32xf32, #tpu.memory_space<vmem>>, vector<8x32xf32>
    tpu.vector_store %arg8[%c0_32, %c0_33], %70 {strides = array<i32>} : memref<8x32xf32, #tpu.memory_space<vmem>>, vector<8x32xf32>,
    %c1_i32 = arith.constant 1 : i32
    %72 = arith.cmpi eq, %arg1, %c1_i32 : i32
    %73 = arith.extui %72 : i1 to i32
    %c0_i32_34 = arith.constant 0 : i32
    %74 = arith.cmpi ne, %73, %c0_i32_34 : i32
    scf.if %74 {
      %c0_35 = arith.constant 0 : index
      %c0_36 = arith.constant 0 : index
      %75 = vector.load %arg8[%c0_35, %c0_36] : memref<8x32xf32, #tpu.memory_space<vmem>>, vector<8x32xf32>
      %c0_37 = arith.constant 0 : index
      %c0_38 = arith.constant 0 : index
      %c0_39 = arith.constant 0 : index
      %76 = vector.load %arg7[%c0_37, %c0_38, %c0_39] : memref<1x8x32xf32, #tpu.memory_space<vmem>>, vector<1x8x32xf32>
      %77 = vector.shape_cast %76 : vector<1x8x32xf32> to vector<8x32xf32>
      %78 = vector.shape_cast %75 : vector<8x32xf32> to vector<1x8x32xf32>
      tpu.vector_store %arg7[%c0_37, %c0_38, %c0_39], %78 {strides = array<i32>} : memref<1x8x32xf32, #tpu.memory_space<vmem>>, vector<1x8x32xf32>,
    } else {
    }
    return
  }
  func.func @transform_0(%arg0: i32, %arg1: i32) -> (i32, i32, i32) {
    %c0_i32 = arith.constant 0 : i32
    %c0_i32_0 = arith.constant 0 : i32
    %c0_i32_1 = arith.constant 0 : i32
    return %arg0, %c0_i32, %c0_i32_0 : i32, i32, i32
  }
  func.func @transform_1(%arg0: i32, %arg1: i32) -> (i32, i32, i32) {
    %c0_i32 = arith.constant 0 : i32
    %c0_i32_0 = arith.constant 0 : i32
    %c0_i32_1 = arith.constant 0 : i32
    return %arg1, %c0_i32, %c0_i32_0 : i32, i32, i32
  }
  func.func @transform_2(%arg0: i32, %arg1: i32) -> (i32, i32, i32) {
    %c0_i32 = arith.constant 0 : i32
    %c0_i32_0 = arith.constant 0 : i32
    %c0_i32_1 = arith.constant 0 : i32
    return %arg1, %c0_i32, %c0_i32_0 : i32, i32, i32
  }
  func.func @transform_3(%arg0: i32, %arg1: i32) -> (i32, i32, i32) {
    %c0_i32 = arith.constant 0 : i32
    %c0_i32_0 = arith.constant 0 : i32
    %c0_i32_1 = arith.constant 0 : i32
    return %arg0, %c0_i32, %c0_i32_0 : i32, i32, i32
  }
  func.func @transform_4(%arg0: i32, %arg1: i32) -> (i32, i32, i32) {
    %c0_i32 = arith.constant 0 : i32
    %c0_i32_0 = arith.constant 0 : i32
    %c0_i32_1 = arith.constant 0 : i32
    return %arg0, %c0_i32, %c0_i32_0 : i32, i32, i32
  }
  func.func @transform_5(%arg0: i32, %arg1: i32) -> (i32, i32, i32) {
    %c0_i32 = arith.constant 0 : i32
    %c0_i32_0 = arith.constant 0 : i32
    %c0_i32_1 = arith.constant 0 : i32
    return %arg0, %c0_i32, %c0_i32_0 : i32, i32, i32
  }
}

</mosaic_0001>

<llo_original>
// kernel: tile.14
$region0: #{tile.14}
  %s0 = inlined_call_operand.vmem [shape: f32[2,8,3,16], index: 0, kind: input, shape index: {}]
  %s1 = inlined_call_operand.vmem [shape: f32[2,8,48], index: 1, kind: output, shape index: {}]
  $region1: #{tile.14} parent=0
    #allocation0 [shape = 'u8[65536]{0}', space=vmem, size = 0x10000, scoped, tag = 'scoped mem for input reshape']
    %s3 = ssub.s32 16, 1
    %s4 = scalar_lea.vmem %s0, 60
    %v5 = vld [vmem:[%s4] sm:%s3]
    %s6 = scalar_lea.vmem [#allocation0], 120
    %7 = vst [vmem:[%s6] sm:%s3] %v5
    %s8 = scalar_lea.vmem %s0, 56
    %v9 = vld [vmem:[%s8] sm:%s3]
    %s10 = scalar_lea.vmem [#allocation0], 112
    %11 = vst [vmem:[%s10] sm:%s3] %v9
    %s12 = scalar_lea.vmem %s0, 52
    %v13 = vld [vmem:[%s12] sm:%s3]
    %s14 = scalar_lea.vmem [#allocation0], 104
    %15 = vst [vmem:[%s14] sm:%s3] %v13
    %s16 = scalar_lea.vmem %s0, 48
    %v17 = vld [vmem:[%s16] sm:%s3]
    %s18 = scalar_lea.vmem [#allocation0], 96
    %19 = vst [vmem:[%s18] sm:%s3] %v17
    %s20 = scalar_lea.vmem %s0, 44
    %v21 = vld [vmem:[%s20] sm:%s3]
    %s22 = scalar_lea.vmem [#allocation0], 88
    %23 = vst [vmem:[%s22] sm:%s3] %v21
    %s24 = scalar_lea.vmem %s0, 40
    %v25 = vld [vmem:[%s24] sm:%s3]
    %s26 = scalar_lea.vmem [#allocation0], 80
    %27 = vst [vmem:[%s26] sm:%s3] %v25
    %s28 = scalar_lea.vmem %s0, 36
    %v29 = vld [vmem:[%s28] sm:%s3]
    %s30 = scalar_lea.vmem [#allocation0], 72
    %31 = vst [vmem:[%s30] sm:%s3] %v29
    %s32 = scalar_lea.vmem %s0, 32
    %v33 = vld [vmem:[%s32] sm:%s3]
    %s34 = scalar_lea.vmem [#allocation0], 64
    %35 = vst [vmem:[%s34] sm:%s3] %v33
    %s36 = scalar_lea.vmem %s0, 28
    %v37 = vld [vmem:[%s36] sm:%s3]
    %s38 = scalar_lea.vmem [#allocation0], 56
    %39 = vst [vmem:[%s38] sm:%s3] %v37
    %s40 = scalar_lea.vmem %s0, 24
    %v41 = vld [vmem:[%s40] sm:%s3]
    %s42 = scalar_lea.vmem [#allocation0], 48
    %43 = vst [vmem:[%s42] sm:%s3] %v41
    %s44 = scalar_lea.vmem %s0, 20
    %v45 = vld [vmem:[%s44] sm:%s3]
    %s46 = scalar_lea.vmem [#allocation0], 40
    %47 = vst [vmem:[%s46] sm:%s3] %v45
    %s48 = scalar_lea.vmem %s0, 16
    %v49 = vld [vmem:[%s48] sm:%s3]
    %s50 = scalar_lea.vmem [#allocation0], 32
    %51 = vst [vmem:[%s50] sm:%s3] %v49
    %s52 = scalar_lea.vmem %s0, 12
    %v53 = vld [vmem:[%s52] sm:%s3]
    %s54 = scalar_lea.vmem [#allocation0], 24
    %55 = vst [vmem:[%s54] sm:%s3] %v53
    %s56 = scalar_lea.vmem %s0, 8
    %v57 = vld [vmem:[%s56] sm:%s3]
    %s58 = scalar_lea.vmem [#allocation0], 16
    %59 = vst [vmem:[%s58] sm:%s3] %v57
    %s60 = scalar_lea.vmem %s0, 4
    %v61 = vld [vmem:[%s60] sm:%s3]
    %s62 = scalar_lea.vmem [#allocation0], 8
    %63 = vst [vmem:[%s62] sm:%s3] %v61
    %v64 = vld [vmem:[%s0] sm:%s3]
    %65 = vst [vmem:[#allocation0] sm:%s3] %v64
    %v66 = vld [vmem:[#allocation0] ss:$8 sm:$0xf]
    %v67 = vld [vmem:[#allocation0] ss:$8 sm:$0xf0]
    %vm68 = vcmask 1047556
    %v69 = vsel %vm68, %v67, %v66
    %vm70 = vcmask 130048
    %71 = vst.msk [vmem:[%s1] sm:$0xff] %vm70, %v69
    %s72 = scalar_lea.vmem [#allocation0], 64
    %v73 = vld [vmem:[%s72] ss:$8 sm:$0xf]
    %s74 = scalar_lea.vmem [#allocation0], 64
    %v75 = vld [vmem:[%s74] ss:$8 sm:$0xf0]
    %vm76 = vcmask 1047556
    %v77 = vsel %vm76, %v75, %v73
    %vm78 = vcmask 130048
    %s79 = scalar_lea.vmem %s1, 8
    %80 = vst.msk [vmem:[%s79] sm:$0xff] %vm78, %v77
    %s81 = scalar_lea.vmem [#allocation0], 2
    %v82 = vld [vmem:[%s81] ss:$8 sm:$0xf]
    %s83 = scalar_lea.vmem [#allocation0], 2
    %v84 = vld [vmem:[%s83] ss:$8 sm:$0xf0]
    %vm85 = vcmask 1047556
    %v86 = vsel %vm85, %v84, %v82
    %87 = vrot.lane.b32.xlu0 %v86, 32
    %v88 = vpop.permute.xlu0 %87
    %vm89 = vcmask 392448
    %90 = vst.msk [vmem:[%s1] sm:$0xff] %vm89, %v88
    %s91 = scalar_lea.vmem [#allocation0], 66
    %v92 = vld [vmem:[%s91] ss:$8 sm:$0xf]
    %s93 = scalar_lea.vmem [#allocation0], 66
    %v94 = vld [vmem:[%s93] ss:$8 sm:$0xf0]
    %vm95 = vcmask 1047556
    %v96 = vsel %vm95, %v94, %v92
    %97 = vrot.lane.b32.xlu0 %v96, 32
    %v98 = vpop.permute.xlu0 %97
    %vm99 = vcmask 392448
    %s100 = scalar_lea.vmem %s1, 8
    %101 = vst.msk [vmem:[%s100] sm:$0xff] %vm99, %v98
    %s102 = scalar_lea.vmem [#allocation0], 1
    %v103 = vld [vmem:[%s102] ss:$8 sm:$0xf]
    %s104 = scalar_lea.vmem [#allocation0], 1
    %v105 = vld [vmem:[%s104] ss:$8 sm:$0xf0]
    %vm106 = vcmask 1047556
    %v107 = vsel %vm106, %v105, %v103
    %108 = vrot.lane.b32.xlu0 %v107, 16
    %v109 = vpop.permute.xlu0 %108
    %vm110 = vcmask 261248
    %111 = vst.msk [vmem:[%s1] sm:$0xff] %vm110, %v109
    %s112 = scalar_lea.vmem [#allocation0], 65
    %v113 = vld [vmem:[%s112] ss:$8 sm:$0xf]
    %s114 = scalar_lea.vmem [#allocation0], 65
    %v115 = vld [vmem:[%s114] ss:$8 sm:$0xf0]
    %vm116 = vcmask 1047556
    %v117 = vsel %vm116, %v115, %v113
    %118 = vrot.lane.b32.xlu0 %v117, 16
    %v119 = vpop.permute.xlu0 %118
    %vm120 = vcmask 261248
    %s121 = scalar_lea.vmem %s1, 8
    %122 = vst.msk [vmem:[%s121] sm:$0xff] %vm120, %v119

// kernel: gemmoe_dyn_attention_forward.1
$region0: #{gemmoe_dyn_attention_forward.1}
  #allocation0 [shape = 'u32[]', space=smem, size = 0x4, offset = 0x4, fixed_abs, tag = 'smem constant byte address 0x4 - core index']
  #allocation1 [shape = 'u32[72,128]{1,0:T(1,128)}', space=vmem, size = 0x9000, scoped, tag = 'internal scratch']
  #allocation2 [shape = 'f32[8,32]{1,0:T(8,128)}', space=vmem, size = 0x1000, scoped, tag = 'scratch operand']
  %s0 = inlined_call_operand.vmem [shape: bf16[2,8,32], index: 0, kind: input, shape index: {}]
  %s1 = inlined_call_operand.vmem [shape: bf16[2,32,112], index: 1, kind: input, shape index: {}]
  %s2 = inlined_call_operand.vmem [shape: bf16[2,32,32], index: 2, kind: input, shape index: {}]
  %s3 = inlined_call_operand.vmem [shape: f32[2,8,48], index: 3, kind: input, shape index: {}]
  %s4 = inlined_call_operand.vmem [shape: f32[2,8,48], index: 4, kind: input, shape index: {}]
  %s5 = inlined_call_operand.hbm [shape: f32[2,8,32], index: 5, kind: output, shape index: {}]
  %s6 = sld [smem:[#allocation0]]
  $region61: #{gemmoe_dyn_attention_forward.1} parent=0
    _
  %s8 = ssub.s32 1, %s6
  %s9 = scalar_select 0, %s8, %s6
  $region1: #{gemmoe_dyn_attention_forward.1} parent=0
    #allocation3 [shape = 'u8[8192]{0}', space=vmem, size = 0x2000, scoped, tag = 'output window, operand 0']
    #allocation4 [shape = 's32[2]{0}', space=sflag, size = 0x8, scoped, tag = 'scoped memory for gemmoe_dyn_attention_forward.1']
    %10 = vsyncpa [#allocation4], 0
    %s11 = scalar_lea.sflag [#allocation4], 1
    %12 = vsyncpa %s11, 0
    loop: start=0, step=1, limit=6
    $region2: #{gemmoe_dyn_attention_forward.1} parent=1 // loop_pre_header
      _
    $region3: #{gemmoe_dyn_attention_forward.1} parent=1 // loop_header
      %s14 = sphi 0, %s18
      %p15 = scmp.ge.s32.totalorder %s14, 6
      %s21 = sphi 0, %s33
      %s22 = sphi 0, %s29
      %s23 = sphi 0, %s21
      %s24 = sphi 0, %s22
      %s25 = sphi 0, %s23
      %s26 = sphi 0, %s24
      %s36 = sphi 0, %s38
      %s39 = sphi 0, %s36
      %s40 = sphi 0, %s39
      %s56 = sphi 0, %s40
      %s62 = sphi 0, %s64
      %s65 = sphi 0, %s62
      %s66 = sphi 0, %s65
      %s82 = sphi 0, %s66
      %s88 = sphi 0, %s90
      %s91 = sphi 0, %s88
      %s92 = sphi 0, %s91
      %s108 = sphi 0, %s92
      %s114 = sphi 0, %s116
      %s117 = sphi 0, %s114
      %s118 = sphi 0, %s117
      %s134 = sphi 0, %s118
      %s140 = sphi 0, %s142
      %s143 = sphi 0, %s140
      %s144 = sphi 0, %s143
      %s160 = sphi 0, %s144
      %s166 = sphi 0, %s168
      %s169 = sphi 0, %s166
      %s170 = sphi 0, %s169
      %s186 = sphi 0, %s170
    $region4: #{gemmoe_dyn_attention_forward.1} parent=1 // loop_header_branch
      %17 = sbr.rel (%p15) target = $region8
    $region5: #{gemmoe_dyn_attention_forward.1} parent=1 // loop_body
      %s19 = ssub.s32 %s14, 1
      %s20 = ssub.s32 %s14, 2
      %s27 = sadd.s32 1, %s22
      %p28 = scmp.ge.s32.totalorder %s27, 2
      %s29 = scalar_select %p28, 0, %s27
      %s30 = sadd.s32 1, %s21
      %s31 = scalar_select %p28, %s30, %s21
      %p32 = scmp.ge.s32.totalorder %s31, 2
      %s33 = scalar_select %p32, 0, %s31
      %s34 = ssub.s32 %s21, %s33
      %p35 = scmp.eq.s32.totalorder %s34, 0
      %s37 = sadd.s32 %s36, 1
      %s38 = scalar_select %p35, %s36, %s37
      %p41 = pneg %p35
      %p42 = scmp.eq.s32.totalorder %s14, 3
      %p43 = por %p41, %p42
      %p44 = scmp.ne.s32.totalorder %s36, %s39
      %p45 = scmp.eq.s32.totalorder %s14, 0
      %p46 = por %p44, %p45
      %p47 = scmp.ne.s32.totalorder %s36, %s39
      %p48 = scmp.eq.s32.totalorder %s19, 3
      %p49 = por %p47, %p48
      %p50 = scmp.ne.s32.totalorder %s39, %s40
      %p51 = scmp.eq.s32.totalorder %s19, 0
      %p52 = por %p50, %p51
      %p53 = scmp.ne.s32.totalorder %s39, %s40
      %p54 = scmp.eq.s32.totalorder %s20, 3
      %p55 = por %p53, %p54
      %p57 = scmp.ne.s32.totalorder %s40, %s56
      %p58 = scmp.eq.s32.totalorder %s20, 0
      %p59 = por %p57, %p58
      %s60 = ssub.s32 %s22, %s29
      %p61 = scmp.eq.s32.totalorder %s60, 0
      %s63 = sadd.s32 %s62, 1
      %s64 = scalar_select %p61, %s62, %s63
      %p67 = pneg %p61
      %p68 = scmp.eq.s32.totalorder %s14, 3
      %p69 = por %p67, %p68
      %p70 = scmp.ne.s32.totalorder %s62, %s65
      %p71 = scmp.eq.s32.totalorder %s14, 0
      %p72 = por %p70, %p71
      %p73 = scmp.ne.s32.totalorder %s62, %s65
      %p74 = scmp.eq.s32.totalorder %s19, 3
      %p75 = por %p73, %p74
      %p76 = scmp.ne.s32.totalorder %s65, %s66
      %p77 = scmp.eq.s32.totalorder %s19, 0
      %p78 = por %p76, %p77
      %p79 = scmp.ne.s32.totalorder %s65, %s66
      %p80 = scmp.eq.s32.totalorder %s20, 3
      %p81 = por %p79, %p80
      %p83 = scmp.ne.s32.totalorder %s66, %s82
      %p84 = scmp.eq.s32.totalorder %s20, 0
      %p85 = por %p83, %p84
      %s86 = ssub.s32 %s22, %s29
      %p87 = scmp.eq.s32.totalorder %s86, 0
      %s89 = sadd.s32 %s88, 1
      %s90 = scalar_select %p87, %s88, %s89
      %p93 = pneg %p87
      %p94 = scmp.eq.s32.totalorder %s14, 3
      %p95 = por %p93, %p94
      %p96 = scmp.ne.s32.totalorder %s88, %s91
      %p97 = scmp.eq.s32.totalorder %s14, 0
      %p98 = por %p96, %p97
      %p99 = scmp.ne.s32.totalorder %s88, %s91
      %p100 = scmp.eq.s32.totalorder %s19, 3
      %p101 = por %p99, %p100
      %p102 = scmp.ne.s32.totalorder %s91, %s92
      %p103 = scmp.eq.s32.totalorder %s19, 0
      %p104 = por %p102, %p103
      %p105 = scmp.ne.s32.totalorder %s91, %s92
      %p106 = scmp.eq.s32.totalorder %s20, 3
      %p107 = por %p105, %p106
      %p109 = scmp.ne.s32.totalorder %s92, %s108
      %p110 = scmp.eq.s32.totalorder %s20, 0
      %p111 = por %p109, %p110
      %s112 = ssub.s32 %s21, %s33
      %p113 = scmp.eq.s32.totalorder %s112, 0
      %s115 = sadd.s32 %s114, 1
      %s116 = scalar_select %p113, %s114, %s115
      %p119 = pneg %p113
      %p120 = scmp.eq.s32.totalorder %s14, 3
      %p121 = por %p119, %p120
      %p122 = scmp.ne.s32.totalorder %s114, %s117
      %p123 = scmp.eq.s32.totalorder %s14, 0
      %p124 = por %p122, %p123
      %p125 = scmp.ne.s32.totalorder %s114, %s117
      %p126 = scmp.eq.s32.totalorder %s19, 3
      %p127 = por %p125, %p126
      %p128 = scmp.ne.s32.totalorder %s117, %s118
      %p129 = scmp.eq.s32.totalorder %s19, 0
      %p130 = por %p128, %p129
      %p131 = scmp.ne.s32.totalorder %s117, %s118
      %p132 = scmp.eq.s32.totalorder %s20, 3
      %p133 = por %p131, %p132
      %p135 = scmp.ne.s32.totalorder %s118, %s134
      %p136 = scmp.eq.s32.totalorder %s20, 0
      %p137 = por %p135, %p136
      %s138 = ssub.s32 %s21, %s33
      %p139 = scmp.eq.s32.totalorder %s138, 0
      %s141 = sadd.s32 %s140, 1
      %s142 = scalar_select %p139, %s140, %s141
      %p145 = pneg %p139
      %p146 = scmp.eq.s32.totalorder %s14, 3
      %p147 = por %p145, %p146
      %p148 = scmp.ne.s32.totalorder %s140, %s143
      %p149 = scmp.eq.s32.totalorder %s14, 0
      %p150 = por %p148, %p149
      %p151 = scmp.ne.s32.totalorder %s140, %s143
      %p152 = scmp.eq.s32.totalorder %s19, 3
      %p153 = por %p151, %p152
      %p154 = scmp.ne.s32.totalorder %s143, %s144
      %p155 = scmp.eq.s32.totalorder %s19, 0
      %p156 = por %p154, %p155
      %p157 = scmp.ne.s32.totalorder %s143, %s144
      %p158 = scmp.eq.s32.totalorder %s20, 3
      %p159 = por %p157, %p158
      %p161 = scmp.ne.s32.totalorder %s144, %s160
      %p162 = scmp.eq.s32.totalorder %s20, 0
      %p163 = por %p161, %p162
      %s164 = ssub.s32 %s21, %s33
      %p165 = scmp.eq.s32.totalorder %s164, 0
      %s167 = sadd.s32 %s166, 1
      %s168 = scalar_select %p165, %s166, %s167
      %p171 = pneg %p165
      %p172 = scmp.eq.s32.totalorder %s14, 3
      %p173 = por %p171, %p172
      %p174 = scmp.ne.s32.totalorder %s166, %s169
      %p175 = scmp.eq.s32.totalorder %s14, 0
      %p176 = por %p174, %p175
      %p177 = scmp.ne.s32.totalorder %s166, %s169
      %p178 = scmp.eq.s32.totalorder %s19, 3
      %p179 = por %p177, %p178
      %p180 = scmp.ne.s32.totalorder %s169, %s170
      %p181 = scmp.eq.s32.totalorder %s19, 0
      %p182 = por %p180, %p181
      %p183 = scmp.ne.s32.totalorder %s169, %s170
      %p184 = scmp.eq.s32.totalorder %s20, 3
      %p185 = por %p183, %p184
      %p187 = scmp.ne.s32.totalorder %s170, %s186
      %p188 = scmp.eq.s32.totalorder %s20, 0
      %p189 = por %p187, %p188
      %p190 = scmp.le.s32.totalorder 1, %s14
      %p191 = scmp.lt.s32.totalorder %s14, 5
      %p192 = pnand %p190, %p191
      %p193 = pneg %p192
      // Predicated region
      $region9: #{gemmoe_dyn_attention_forward.1} parent=5 // pred_check
        _
      $region10: #{gemmoe_dyn_attention_forward.1} parent=5 // pred_check_branch
        %195 = sbr.rel (%p192) target = $region12
      $region11: #{gemmoe_dyn_attention_forward.1} parent=5 // pred_region
        %s196 = ssub.s32 %s14, 1
      $region12: #{gemmoe_dyn_attention_forward.1} parent=5 // pred_fallthru
        _
      %p197 = scmp.lt.s32.totalorder %s14, 4
      // Predicated region
      $region13: #{gemmoe_dyn_attention_forward.1} parent=5 // pred_check
        %p198 = pneg %p197
      $region14: #{gemmoe_dyn_attention_forward.1} parent=5 // pred_check_branch
        %200 = sbr.rel (%p198) target = $region16
      $region15: #{gemmoe_dyn_attention_forward.1} parent=5 // pred_region
        // Predicated region
        $region17: #{gemmoe_dyn_attention_forward.1} parent=15 // pred_check
          %p201 = pneg %p46
        $region18: #{gemmoe_dyn_attention_forward.1} parent=15 // pred_check_branch
          %203 = sbr.rel (%p201) target = $region20
        $region19: #{gemmoe_dyn_attention_forward.1} parent=15 // pred_region
          %p204 = scmp.lt.s32.totalorder %s21, 1
          %s205 = scalar_select %p204, %s21, 1
          %s206 = smul.addr %s205, 4
          %s207 = scalar_lea.vmem %s0, %s206
        $region20: #{gemmoe_dyn_attention_forward.1} parent=15 // pred_fallthru
          _
        // Predicated region
        $region21: #{gemmoe_dyn_attention_forward.1} parent=15 // pred_check
          %p208 = pneg %p72
        $region22: #{gemmoe_dyn_attention_forward.1} parent=15 // pred_check_branch
          %210 = sbr.rel (%p208) target = $region24
        $region23: #{gemmoe_dyn_attention_forward.1} parent=15 // pred_region
          %p211 = scmp.lt.s32.totalorder %s22, 1
          %s212 = scalar_select %p211, %s22, 1
          %s213 = smul.addr %s212, 4
          %s214 = smul.addr %s213, 4
          %s215 = scalar_lea.vmem %s1, %s214
        $region24: #{gemmoe_dyn_attention_forward.1} parent=15 // pred_fallthru
          _
        // Predicated region
        $region25: #{gemmoe_dyn_attention_forward.1} parent=15 // pred_check
          %p216 = pneg %p98
        $region26: #{gemmoe_dyn_attention_forward.1} parent=15 // pred_check_branch
          %218 = sbr.rel (%p216) target = $region28
        $region27: #{gemmoe_dyn_attention_forward.1} parent=15 // pred_region
          %p219 = scmp.lt.s32.totalorder %s22, 1
          %s220 = scalar_select %p219, %s22, 1
          %s221 = smul.addr %s220, 4
          %s222 = smul.addr %s221, 4
          %s223 = scalar_lea.vmem %s2, %s222
        $region28: #{gemmoe_dyn_attention_forward.1} parent=15 // pred_fallthru
          _
        // Predicated region
        $region29: #{gemmoe_dyn_attention_forward.1} parent=15 // pred_check
          %p224 = pneg %p124
        $region30: #{gemmoe_dyn_attention_forward.1} parent=15 // pred_check_branch
          %226 = sbr.rel (%p224) target = $region32
        $region31: #{gemmoe_dyn_attention_forward.1} parent=15 // pred_region
          %p227 = scmp.lt.s32.totalorder %s21, 1
          %s228 = scalar_select %p227, %s21, 1
          %s229 = smul.addr %s228, 8
          %s230 = scalar_lea.vmem %s3, %s229
        $region32: #{gemmoe_dyn_attention_forward.1} parent=15 // pred_fallthru
          _
        // Predicated region
        $region33: #{gemmoe_dyn_attention_forward.1} parent=15 // pred_check
          %p231 = pneg %p150
        $region34: #{gemmoe_dyn_attention_forward.1} parent=15 // pred_check_branch
          %233 = sbr.rel (%p231) target = $region36
        $region35: #{gemmoe_dyn_attention_forward.1} parent=15 // pred_region
          %p234 = scmp.lt.s32.totalorder %s21, 1
          %s235 = scalar_select %p234, %s21, 1
          %s236 = smul.addr %s235, 8
          %s237 = scalar_lea.vmem %s4, %s236
        $region36: #{gemmoe_dyn_attention_forward.1} parent=15 // pred_fallthru
          _
      $region16: #{gemmoe_dyn_attention_forward.1} parent=5 // pred_fallthru
        _
      %p238 = scmp.le.s32.totalorder 1, %s14
      %p239 = scmp.lt.s32.totalorder %s14, 5
      %p240 = pnand %p238, %p239
      %p241 = pneg %p240
      // Predicated region
      $region37: #{gemmoe_dyn_attention_forward.1} parent=5 // pred_check
        _
      $region38: #{gemmoe_dyn_attention_forward.1} parent=5 // pred_check_branch
        %243 = sbr.rel (%p240) target = $region40
      $region39: #{gemmoe_dyn_attention_forward.1} parent=5 // pred_region
        %s244 = ssub.s32 %s14, 1
        %p245 = scmp.lt.s32.totalorder %s23, 1
        %s246 = scalar_select %p245, %s23, 1
        %s247 = smul.addr %s246, 4
        %s248 = scalar_lea.vmem %s0, %s247
        %p249 = pneg %p52
        %p250 = pneg %p49
        %p251 = scmp.lt.s32.totalorder %s24, 1
        %s252 = scalar_select %p251, %s24, 1
        %s253 = smul.addr %s252, 4
        %s254 = smul.addr %s253, 4
        %s255 = scalar_lea.vmem %s1, %s254
        %p256 = pneg %p78
        %p257 = pneg %p75
        %p258 = scmp.lt.s32.totalorder %s24, 1
        %s259 = scalar_select %p258, %s24, 1
        %s260 = smul.addr %s259, 4
        %s261 = smul.addr %s260, 4
        %s262 = scalar_lea.vmem %s2, %s261
        %p263 = pneg %p104
        %p264 = pneg %p101
        %p265 = scmp.lt.s32.totalorder %s23, 1
        %s266 = scalar_select %p265, %s23, 1
        %s267 = smul.addr %s266, 8
        %s268 = scalar_lea.vmem %s3, %s267
        %p269 = pneg %p130
        %p270 = pneg %p127
        %p271 = scmp.lt.s32.totalorder %s23, 1
        %s272 = scalar_select %p271, %s23, 1
        %s273 = smul.addr %s272, 8
        %s274 = scalar_lea.vmem %s4, %s273
        %p275 = pneg %p156
        %p276 = pneg %p153
        %p277 = pneg %p182
        %p278 = pneg %p179
        %s279 = sand.u32 %s169, 1
        %s280 = scalar_lea.sflag [#allocation4], %s279
        %s281 = sand.u32 %s169, 1
        %s282 = smul.addr %s281, 8
        %s283 = scalar_lea.vmem [#allocation3], %s282
        %p284 = scmp.lt.s32.totalorder %s23, 1
        %s285 = scalar_select %p284, %s23, 1
        %s286 = smul.addr %s285, 4
        %s287 = scalar_lea.vmem %s0, %s286
        %p288 = scmp.lt.s32.totalorder %s24, 1
        %s289 = scalar_select %p288, %s24, 1
        %s290 = smul.addr %s289, 4
        %s291 = smul.addr %s290, 4
        %s292 = scalar_lea.vmem %s1, %s291
        %p293 = scmp.lt.s32.totalorder %s24, 1
        %s294 = scalar_select %p293, %s24, 1
        %s295 = smul.addr %s294, 4
        %s296 = smul.addr %s295, 4
        %s297 = scalar_lea.vmem %s2, %s296
        %p298 = scmp.lt.s32.totalorder %s23, 1
        %s299 = scalar_select %p298, %s23, 1
        %s300 = smul.addr %s299, 8
        %s301 = scalar_lea.vmem %s3, %s300
        %p302 = scmp.lt.s32.totalorder %s23, 1
        %s303 = scalar_select %p302, %s23, 1
        %s304 = smul.addr %s303, 8
        %s305 = scalar_lea.vmem %s4, %s304
        %v307 = vld [vmem:[%s287] sm:$0xf]
        %v308 = vld [vmem:[%s292] sm:$0xf]
        %v309 = vld [vmem:[%s292 + $0x4] sm:$0xf]
        %v310 = vld [vmem:[%s292 + $0x8] sm:$0xf]
        %v311 = vld [vmem:[%s292 + $0xc] sm:$0xf]
        %v316 = vunpack.c.l.b16 %v308
        %v317 = vunpack.c.l.b16 %v309
        %v318 = vunpack.c.l.b16 %v310
        %v319 = vunpack.c.l.b16 %v311
        %v320 = vpack.c.b16 %v317, %v316
        %v321 = vpack.c.b16 %v319, %v318
        %vm324 = vcmask 261120
        %v326 = vsel %vm324, %v307, 0
        %328 = vmatpush.bf16.msra.mxu0 0
        %329 = vmatpush.bf16.msra.mxu0 0
        %330 = vmatpush.bf16.msra.mxu0 0
        %331 = vmatpush.bf16.msra.mxu0 0
        %332 = vmatpush.bf16.msra.mxu0 0
        %333 = vmatpush.bf16.msra.mxu0 0
        %334 = vmatpush.bf16.msra.mxu0 %v321
        %335 = vmatpush.bf16.msra.mxu0 %v320
        %336 = vmatmul.bf16.gmra.mxu0 %v326
        %v337 = vpop.f32.mrf.mxu0
        %v338 = vadd.f32 0.0, %v337
        %v339 = vpop.f32.mrf.mxu0
        %340 = vdwg.mxu0
        %v341 = vld [vmem:[%s301] sm:$0xff]
        %v342 = vld [vmem:[%s305] sm:$0xff]
        %v343 = vmul.f32 %v338, %v341
        %345 = vrot.lane.b32.xlu0 %v342, 48
        %v346 = vpop.permute.xlu0 %345
        %v348 = vmul.f32 %v338, %v346
        %350 = vrot.lane.b32.xlu0 %v348, 80
        %v351 = vpop.permute.xlu0 %350
        %v353 = vadd.f32 %v343, %v351
        %v354 = vpack.c.bf16 %v338, %v338
        %v355 = vpack.c.bf16 %v353, %v353
        %v356 = vlaneseq
        %v357 = vshrl.u32 %v356, 7
        %v358 = vlaneseq
        %v359 = vand.u32 %v358, 127
        %vm360 = vcmp.le.s32.totalorder %v359, %v357
        %362 = vrot.lane.b32.xlu0 %v355, 96
        %v363 = vpop.permute.xlu0 %362
        %vm364 = vcmask 130048
        %v366 = vsel %vm364, %v355, 0
        %v369 = vsel %vm364, %v363, 0
        %371 = vmatpush.bf16.xpose.msra.mxu0 0
        %372 = vmatpush.bf16.xpose.msra.mxu0 0
        %373 = vmatpush.bf16.xpose.msra.mxu0 0
        %374 = vmatpush.bf16.xpose.msra.mxu0 0
        %375 = vmatpush.bf16.xpose.msra.mxu0 0
        %376 = vmatpush.bf16.xpose.msra.mxu0 0
        %377 = vmatpush.bf16.xpose.msra.mxu0 0
        %378 = vmatpush.bf16.xpose.msra.mxu0 %v369
        %379 = vmatmul.bf16.gmra.mxu0 %v366
        %v380 = vpop.f32.mrf.mxu0
        %v381 = vadd.f32 0.0, %v380
        %v382 = vpop.f32.mrf.mxu0
        %383 = vdwg.mxu0
        %v384 = vsel %vm360, %v381, -1e+30
        %vm385 = vcmask 64512
        %v386 = vsel %vm385, %v384, -inf
        %387 = vmax.xlane.f32.xlu0 %v386
        %v388 = vpop.xlane.xlu0 %387
        %v389 = vsub.f32 %v384, %v388
        %v390 = vmul.f32 %v389, 1.442695
        %v391 = vpow.pop %v390
        %v392 = vsel %vm385, %v391, 0.0
        %393 = vadd.xlane.f32.xlu0 %v392
        %v394 = vpop.xlane.xlu0 %393
        %v395 = vrcp.pop %v394
        %v396 = vmul.f32 %v391, %v395
        %v397 = vpack.c.bf16 %v396, %v396
        %399 = vrot.lane.b32.xlu0 %v354, 32
        %v400 = vpop.permute.xlu0 %399
        %v402 = vsel %vm385, %v397, 0
        %vm404 = vcmask 1043456
        %v406 = vsel %vm404, %v400, 0
        %408 = vmatpush.bf16.msra.mxu0 0
        %409 = vmatpush.bf16.msra.mxu0 0
        %410 = vmatpush.bf16.msra.mxu0 0
        %411 = vmatpush.bf16.msra.mxu0 0
        %412 = vmatpush.bf16.msra.mxu0 0
        %413 = vmatpush.bf16.msra.mxu0 0
        %414 = vmatpush.bf16.msra.mxu0 0
        %415 = vmatpush.bf16.msra.mxu0 %v406
        %416 = vmatmul.bf16.gmra.mxu0 %v402
        %v417 = vpop.f32.mrf.mxu0
        %v418 = vadd.f32 0.0, %v417
        %v419 = vpop.f32.mrf.mxu0
        %420 = vdwg.mxu0
        %v421 = vld [vmem:[%s297] sm:$0xf]
        %v422 = vld [vmem:[%s297 + $0x4] sm:$0xf]
        %v423 = vpack.c.bf16 %v418, %v418
        %424 = vrot.lane.b32.xlu0 %v355, 112
        %v425 = vpop.permute.xlu0 %424
        %v427 = vsel %vm364, %v425, 0
        %429 = vmatpush.bf16.xpose.msra.mxu0 0
        %430 = vmatpush.bf16.xpose.msra.mxu0 0
        %431 = vmatpush.bf16.xpose.msra.mxu0 0
        %432 = vmatpush.bf16.xpose.msra.mxu0 0
        %433 = vmatpush.bf16.xpose.msra.mxu0 0
        %434 = vmatpush.bf16.xpose.msra.mxu0 0
        %435 = vmatpush.bf16.xpose.msra.mxu0 0
        %436 = vmatpush.bf16.xpose.msra.mxu0 %v369
        %437 = vmatmul.bf16.gmra.mxu0 %v427
        %v438 = vpop.f32.mrf.mxu0
        %v439 = vadd.f32 0.0, %v438
        %v440 = vpop.f32.mrf.mxu0
        %441 = vdwg.mxu0
        %v442 = vsel %vm360, %v439, -1e+30
        %v443 = vsel %vm385, %v442, -inf
        %444 = vmax.xlane.f32.xlu0 %v443
        %v445 = vpop.xlane.xlu0 %444
        %v446 = vsub.f32 %v442, %v445
        %v447 = vmul.f32 %v446, 1.442695
        %v448 = vpow.pop %v447
        %v449 = vsel %vm385, %v448, 0.0
        %450 = vadd.xlane.f32.xlu0 %v449
        %v451 = vpop.xlane.xlu0 %450
        %v452 = vrcp.pop %v451
        %v453 = vmul.f32 %v448, %v452
        %v454 = vpack.c.bf16 %v453, %v453
        %v456 = vsel %vm385, %v454, 0
        %458 = vmatpush.bf16.msra.mxu0 0
        %459 = vmatpush.bf16.msra.mxu0 0
        %460 = vmatpush.bf16.msra.mxu0 0
        %461 = vmatpush.bf16.msra.mxu0 0
        %462 = vmatpush.bf16.msra.mxu0 0
        %463 = vmatpush.bf16.msra.mxu0 0
        %464 = vmatpush.bf16.msra.mxu0 0
        %465 = vmatpush.bf16.msra.mxu0 %v406
        %466 = vmatmul.bf16.gmra.mxu0 %v456
        %v467 = vpop.f32.mrf.mxu0
        %v468 = vadd.f32 0.0, %v467
        %v469 = vpop.f32.mrf.mxu0
        %470 = vdwg.mxu0
        %v471 = vld [vmem:[%s297 + $0x8] sm:$0xf]
        %v472 = vld [vmem:[%s297 + $0xc] sm:$0xf]
        %v473 = vpack.c.bf16 %v468, %v468
        %v476 = vunpack.c.l.b16 %v471
        %v477 = vunpack.c.l.b16 %v472
        %v478 = vpack.c.b16 %v477, %v476
        %v481 = vsel %vm364, %v473, 0
        %483 = vmatpush.bf16.msra.mxu0 0
        %484 = vmatpush.bf16.msra.mxu0 0
        %485 = vmatpush.bf16.msra.mxu0 0
        %486 = vmatpush.bf16.msra.mxu0 0
        %487 = vmatpush.bf16.msra.mxu0 0
        %488 = vmatpush.bf16.msra.mxu0 0
        %489 = vmatpush.bf16.msra.mxu0 0
        %490 = vmatpush.bf16.msra.mxu0 %v478
        %491 = vmatmul.bf16.gmra.mxu0 %v481
        %v492 = vpop.f32.mrf.mxu0
        %v493 = vadd.f32 0.0, %v492
        %v494 = vpop.f32.mrf.mxu0
        %495 = vdwg.mxu0
        %v498 = vunpack.c.l.b16 %v421
        %v499 = vunpack.c.l.b16 %v422
        %v500 = vpack.c.b16 %v499, %v498
        %v503 = vsel %vm364, %v423, 0
        %505 = vmatpush.bf16.msra.mxu0 0
        %506 = vmatpush.bf16.msra.mxu0 0
        %507 = vmatpush.bf16.msra.mxu0 0
        %508 = vmatpush.bf16.msra.mxu0 0
        %509 = vmatpush.bf16.msra.mxu0 0
        %510 = vmatpush.bf16.msra.mxu0 0
        %511 = vmatpush.bf16.msra.mxu0 0
        %512 = vmatpush.bf16.msra.mxu0 %v500
        %513 = vmatmul.bf16.gmra.mxu0 %v503
        %v514 = vpop.f32.mrf.mxu0
        %v515 = vadd.f32 %v493, %v514
        %v516 = vpop.f32.mrf.mxu0
        %517 = vdwg.mxu0
        %p518 = scmp.eq.s32.totalorder %s24, 0
        // Predicated region
        $region41: #{gemmoe_dyn_attention_forward.1} parent=39 // pred_check
          %p519 = pneg %p518
        $region42: #{gemmoe_dyn_attention_forward.1} parent=39 // pred_check_branch
          %521 = sbr.rel (%p519) target = $region44
        $region43: #{gemmoe_dyn_attention_forward.1} parent=39 // pred_region
          %522 = vst.msk [vmem:[#allocation2] sm:$0xff] %vm324, 0.0
        $region44: #{gemmoe_dyn_attention_forward.1} parent=39 // pred_fallthru
          _
        %v523 = vld [vmem:[#allocation2] sm:$0xff]
        %v524 = vadd.f32 %v523, %v515
        %525 = vst.msk [vmem:[#allocation2] sm:$0xff] %vm324, %v524
        %p526 = scmp.eq.s32.totalorder %s24, 1
        // Predicated region
        $region45: #{gemmoe_dyn_attention_forward.1} parent=39 // pred_check
          %p527 = pneg %p526
        $region46: #{gemmoe_dyn_attention_forward.1} parent=39 // pred_check_branch
          %529 = sbr.rel (%p527) target = $region48
        $region47: #{gemmoe_dyn_attention_forward.1} parent=39 // pred_region
          %v530 = vld [vmem:[#allocation2] sm:$0xff]
          %531 = vst.msk [vmem:[%s283] sm:$0xff] %vm324, %v530
        $region48: #{gemmoe_dyn_attention_forward.1} parent=39 // pred_fallthru
          _
        %s532 = sand.u32 %s169, 1
        %s533 = scalar_lea.sflag [#allocation4], %s532
        %s534 = sand.u32 %s169, 1
        %s535 = smul.addr %s534, 8
        %s536 = scalar_lea.vmem [#allocation3], %s535
        // Predicated region
        $region49: #{gemmoe_dyn_attention_forward.1} parent=39 // pred_check
          %p537 = pneg %p179
        $region50: #{gemmoe_dyn_attention_forward.1} parent=39 // pred_check_branch
          %539 = sbr.rel (%p537) target = $region52
        $region51: #{gemmoe_dyn_attention_forward.1} parent=39 // pred_region
          %541 = vsyncadd %s533, 0
          %s542 = smul.addr %s23, 8
          %s543 = scalar_lea.hbm %s5, %s542
          %s545 = sshll.u32 %s536, 4
          %s546 = int_to_ptr.vmem [resolvable:$true] %s545
          %s547 = sshll.u32 %s543, 4
          %s548 = int_to_ptr.hbm [resolvable:$true] %s547
          %550 = dma.vmem_to_hbm [thread:$0]  %s546, 128, %s548, %s533
        $region52: #{gemmoe_dyn_attention_forward.1} parent=39 // pred_fallthru
          _
      $region40: #{gemmoe_dyn_attention_forward.1} parent=5 // pred_fallthru
        _
      %p551 = scmp.le.s32.totalorder 2, %s14
      // Predicated region
      $region53: #{gemmoe_dyn_attention_forward.1} parent=5 // pred_check
        %p552 = pneg %p551
      $region54: #{gemmoe_dyn_attention_forward.1} parent=5 // pred_check_branch
        %554 = sbr.rel (%p552) target = $region56
      $region55: #{gemmoe_dyn_attention_forward.1} parent=5 // pred_region
        %s555 = ssub.s32 %s14, 2
        // Predicated region
        $region57: #{gemmoe_dyn_attention_forward.1} parent=55 // pred_check
          %p556 = pneg %p185
        $region58: #{gemmoe_dyn_attention_forward.1} parent=55 // pred_check_branch
          %558 = sbr.rel (%p556) target = $region60
        $region59: #{gemmoe_dyn_attention_forward.1} parent=55 // pred_region
          %s559 = sand.u32 %s170, 1
          %s560 = scalar_lea.sflag [#allocation4], %s559
          %s561 = sand.u32 %s170, 1
          %s562 = smul.addr %s561, 8
          %s563 = scalar_lea.vmem [#allocation3], %s562
          %565 = dma.done %s560, 128
        $region60: #{gemmoe_dyn_attention_forward.1} parent=55 // pred_fallthru
          _
      $region56: #{gemmoe_dyn_attention_forward.1} parent=5 // pred_fallthru
        _
    $region6: #{gemmoe_dyn_attention_forward.1} parent=1 // loop_footer
      %s18 = sadd.s32 1, %s14
    $region7: #{gemmoe_dyn_attention_forward.1} parent=1 // loop_footer_branch
      %13 = sbr.rel target = $region3
    $region8: #{gemmoe_dyn_attention_forward.1} parent=1 // loop_exit
      _
    %566 = vsyncpa [#allocation4], 1
    %s567 = scalar_lea.sflag [#allocation4], 1
    %568 = vsyncpa %s567, 1

</llo_original>
